<compile_context>
chip_gen: v5e
topology: v5e:2x2
jax: 0.10.0
libtpu: 0.0.40
codegen_flags: <defaults>
</compile_context>

<pallas_src>
import math

import jax
import jax.numpy as jnp
from jax.experimental import pallas as pl
from jax.experimental.pallas import tpu as pltpu

LANE = 128
_TARGET_BLOCK_BYTES = 2 * 1024 * 1024  # safe double-buffered on v5e/v6e/v7x


def _copy_kernel(x_ref, o_ref):
    # Reshape has no compute; the kernel is a straight VMEM tile copy.
    o_ref[...] = x_ref[...]


def _resolve_target_dim(total, dim):
    """Resolve a single -1 like torch.reshape does."""
    dim = list(dim)
    neg = [i for i, d in enumerate(dim) if d == -1]
    if neg:
        assert len(neg) == 1, "only one -1 allowed in reshape dims"
        known = 1
        for d in dim:
            if d != -1:
                known *= d
        dim[neg[0]] = total // known
    prod = 1
    for d in dim:
        prod *= d
    assert prod == total, "reshape size mismatch"
    return tuple(dim)


def pallas_reshape(x, target_dim):
    """Pallas equivalent of vmamba.Reshape(*target_dim).forward(x)."""
    total = x.size
    target_dim = _resolve_target_dim(total, target_dim)

    dtype = x.dtype
    itemsize = jnp.dtype(dtype).itemsize

    flat = x.reshape(-1)  # metadata-only for a contiguous row-major array

    rem = total % LANE
    if rem != 0:
        # Rare fallback (total not a multiple of 128); pad up to a lane
        # multiple.  Never taken for typical (B, C, H, W) vmamba shapes.
        flat = jnp.pad(flat, (0, LANE - rem))
    padded_total = flat.size
    rows = padded_total // LANE
    slab = flat.reshape(rows, LANE)  # metadata-only

    # Dtype-aware sublane multiple: 8 for 32-bit, 16 for bf16/f16, 32 for int8.
    sub = max(8, 32 // itemsize)
    block_rows = (_TARGET_BLOCK_BYTES // (LANE * itemsize)) // sub * sub
    block_rows = max(sub, block_rows)
    if rows <= block_rows:
        # Single block spanning the whole slab: full-extent dims are always
        # legal regardless of the (8,128) divisibility rule.
        block_rows = rows
    grid = (pl.cdiv(rows, block_rows),)

    out = pl.pallas_call(
        _copy_kernel,
        out_shape=jax.ShapeDtypeStruct((rows, LANE), dtype),
        grid=grid,
        in_specs=[pl.BlockSpec((block_rows, LANE), lambda i: (i, 0))],
        out_specs=pl.BlockSpec((block_rows, LANE), lambda i: (i, 0)),
        compiler_params=pltpu.CompilerParams(
            dimension_semantics=("parallel",),
            vmem_limit_bytes=32 * 1024 * 1024,
        ),
        cost_estimate=pl.CostEstimate(
            flops=0,
            transcendentals=0,
            bytes_accessed=2 * total * itemsize,
        ),
    )(slab)

    out_flat = out.reshape(-1)
    if rem != 0:
        out_flat = out_flat[:total]
    # Final reshape to the module's target dims is pure metadata.
    return out_flat.reshape(*target_dim)


if __name__ == "__main__":
    key = jax.random.PRNGKey(0)
    B, C, H, W = 2, 4, 16, 16
    x = jax.random.normal(key, (B, C, H, W), dtype=jnp.float32)

    # Reshape(B, C, H*W), as the module would be instantiated in vmamba.
    target_dim = (B, C, H * W)
    y = pallas_reshape(x, target_dim)
    y = jax.block_until_ready(y)

    # Correctness check against plain JAX reshape (same semantics as torch).
    ref = x.reshape(*target_dim)
    assert y.shape == ref.shape
    assert y.dtype == ref.dtype
    assert bool(jnp.all(y == ref))

    # Also exercise a -1 dim, as the torch module allows.
    y2 = jax.block_until_ready(pallas_reshape(x, (B, -1)))
    assert bool(jnp.all(y2 == x.reshape(B, -1)))

    print("KERNEL_OK")
</pallas_src>

<mosaic_0001>
module attributes {stable_mosaic.version = 11 : i64} {
  func.func @_copy_kernel(%arg0: i32, %arg1: memref<16x128xf32, #tpu.memory_space<vmem>>, %arg2: memref<16x128xf32, #tpu.memory_space<vmem>>) attributes {dimension_semantics = [#tpu.dimension_semantics<parallel>], iteration_bounds = array<i64: 1>, scalar_prefetch = 0 : i64, scratch_operands = 0 : i64, tpu.core_type = #tpu.core_type<tc>, window_params = [{transform_indices = @transform_0, window_bounds = array<i64: 16, 128>}, {transform_indices = @transform_1, window_bounds = array<i64: 16, 128>}]} {
    %c0 = arith.constant 0 : index
    %c0_0 = arith.constant 0 : index
    %0 = vector.load %arg1[%c0, %c0_0] : memref<16x128xf32, #tpu.memory_space<vmem>>, vector<16x128xf32>
    %c0_1 = arith.constant 0 : index
    %c0_2 = arith.constant 0 : index
    %1 = vector.load %arg2[%c0_1, %c0_2] : memref<16x128xf32, #tpu.memory_space<vmem>>, vector<16x128xf32>
    tpu.vector_store %arg2[%c0_1, %c0_2], %0 {strides = array<i32>} : memref<16x128xf32, #tpu.memory_space<vmem>>, vector<16x128xf32>,
    return
  }
  func.func @transform_0(%arg0: i32) -> (i32, i32) {
    %c0_i32 = arith.constant 0 : i32
    %c0_i32_0 = arith.constant 0 : i32
    return %arg0, %c0_i32 : i32, i32
  }
  func.func @transform_1(%arg0: i32) -> (i32, i32) {
    %c0_i32 = arith.constant 0 : i32
    %c0_i32_0 = arith.constant 0 : i32
    return %arg0, %c0_i32 : i32, i32
  }
}

</mosaic_0001>

<llo_original>
// kernel: tpu_custom_call.1
$region0: #{tpu_custom_call.1}
  #allocation0 [shape = 'u32[]', space=smem, size = 0x4, offset = 0x4, fixed_abs, tag = 'smem constant byte address 0x4 - core index']
  #allocation1 [shape = 'u32[72,128]{1,0:T(1,128)}', space=vmem, size = 0x9000, scoped, tag = 'internal scratch']
  %s0 = inlined_call_operand.hbm [shape: f32[16,128], index: 0, kind: input, shape index: {}]
  %s1 = inlined_call_operand.hbm [shape: f32[16,128], index: 1, kind: output, shape index: {}]
  %s2 = sld [smem:[#allocation0]]
  $region18: #{tpu_custom_call.1} parent=0
    _
  %s4 = ssub.s32 1, %s2
  %s5 = scalar_select 0, %s4, %s2
  $region1: #{tpu_custom_call.1} parent=0
    #allocation2 [shape = 'u8[8192]{0}', space=vmem, size = 0x2000, scoped, tag = 'input window, operand 0, single buffered']
    #allocation3 [shape = 's32[1]{0}', space=sflag, size = 0x4, scoped, tag = 'scoped memory for tpu_custom_call.1']
    #allocation4 [shape = 's32[1]{0}', space=sflag, size = 0x4, scoped, tag = 'scoped memory for tpu_custom_call.1']
    #allocation5 [shape = 'u8[8192]{0}', space=vmem, size = 0x2000, scoped, tag = 'output window, operand 0, single buffered']
    %6 = vsyncpa [#allocation3], 0
    %7 = vsyncpa [#allocation4], 0
    // Predicated region
    $region2: #{tpu_custom_call.1} parent=1 // pred_check
      _
    $region3: #{tpu_custom_call.1} parent=1 // pred_check_branch
      %9 = sbr.rel (0) target = $region5
    $region4: #{tpu_custom_call.1} parent=1 // pred_region
      %11 = vsyncadd [#allocation3], 0
      %s12 = sshll.u32 %s0, 4
      %s13 = int_to_ptr.hbm [resolvable:$true] %s12
      %s14 = sshll.u32 [#allocation2], 4
      %s15 = int_to_ptr.vmem [resolvable:$true] %s14
      %20 = dma.hbm_to_vmem [thread:$0]  %s13, 256, %s15, [#allocation3], 128, 128, 8
    $region5: #{tpu_custom_call.1} parent=1 // pred_fallthru
      _
    // Predicated region
    $region6: #{tpu_custom_call.1} parent=1 // pred_check
      _
    $region7: #{tpu_custom_call.1} parent=1 // pred_check_branch
      %22 = sbr.rel (0) target = $region9
    $region8: #{tpu_custom_call.1} parent=1 // pred_region
      %24 = dma.done [#allocation3], 256
    $region9: #{tpu_custom_call.1} parent=1 // pred_fallthru
      _
    %v25 = vld [vmem:[#allocation2] sm:$0xff]
    %v26 = vld [vmem:[#allocation2 + $0x8] sm:$0xff]
    %27 = vst [vmem:[#allocation5] sm:$0xff] %v25
    %28 = vst [vmem:[#allocation5 + $0x8] sm:$0xff] %v26
    // Predicated region
    $region10: #{tpu_custom_call.1} parent=1 // pred_check
      _
    $region11: #{tpu_custom_call.1} parent=1 // pred_check_branch
      %30 = sbr.rel (0) target = $region13
    $region12: #{tpu_custom_call.1} parent=1 // pred_region
      %32 = vsyncadd [#allocation4], 0
      %s33 = sshll.u32 [#allocation5], 4
      %s34 = int_to_ptr.vmem [resolvable:$true] %s33
      %s35 = sshll.u32 %s1, 4
      %s36 = int_to_ptr.hbm [resolvable:$true] %s35
      %41 = dma.vmem_to_hbm [thread:$0]  %s34, 256, %s36, [#allocation4], 128, 128, 8
    $region13: #{tpu_custom_call.1} parent=1 // pred_fallthru
      _
    // Predicated region
    $region14: #{tpu_custom_call.1} parent=1 // pred_check
      _
    $region15: #{tpu_custom_call.1} parent=1 // pred_check_branch
      %43 = sbr.rel (0) target = $region17
    $region16: #{tpu_custom_call.1} parent=1 // pred_region
      %45 = dma.done [#allocation4], 256
    $region17: #{tpu_custom_call.1} parent=1 // pred_fallthru
      _
    %46 = vsyncpa [#allocation3], 1
    %47 = vsyncpa [#allocation4], 1

</llo_original>
